<compile_context>
chip_gen: v5e
topology: v5e:2x2
jax: 0.10.0
libtpu: 0.0.40
codegen_flags: <defaults>
</compile_context>

<pallas_src>
import functools

import jax
import jax.numpy as jnp
from jax.experimental import pallas as pl
from jax.experimental.pallas import tpu as pltpu

_LANES = 128
# Total double-buffered VMEM budget for all streamed inputs (fits v5e's 16 MiB
# default scoped-VMEM limit; v6e/v7x defaults are 32 MiB).
_VMEM_BUDGET_BYTES = 12 * 1024 * 1024


def _sublane_mult(dtype):
    # Packed sublane multiple: 8 for 4-byte, 16 for 2-byte, 32 for 1-byte.
    return max(8, 32 // jnp.dtype(dtype).itemsize)


def _round_up(x, m):
    return ((x + m - 1) // m) * m


def _pick_tile_rows(total_rows, row_bytes, sub_mult):
    """Rows per tile: as big as the VMEM budget allows, but >= 2 grid steps."""
    budget_rows = (_VMEM_BUDGET_BYTES // (2 * row_bytes)) // sub_mult * sub_mult
    budget_rows = max(sub_mult, budget_rows)
    # Keep at least two grid steps on medium/large inputs so v7x's two
    # TensorCores both stream (grid axis is marked "parallel").
    split_rows = _round_up(max(1, (total_rows + 1) // 2), sub_mult)
    return max(sub_mult, min(budget_rows, split_rows))


def _fcmse_partial_kernel(*refs, use_tw, tile_rows, valid_rows, needs_mask):
    """Per-tile partial sum of (optionally weighted) squared differences."""
    if use_tw:
        pred_ref, gt_ref, w_ref, out_ref = refs
    else:
        pred_ref, gt_ref, out_ref = refs
    diff = pred_ref[...].astype(jnp.float32) - gt_ref[...].astype(jnp.float32)
    if use_tw:
        # w_ref is either the same shape as the data tile (flat path) or
        # (tile_rows, 1) compact per-(b, j) weights; both broadcast correctly.
        diff = diff * w_ref[...].astype(jnp.float32)
    sq = diff * diff
    if needs_mask:
        # Partial edge blocks contain unspecified data out of bounds; use a
        # select (not a multiply) so NaN/Inf garbage cannot leak into the sum.
        row = (jax.lax.broadcasted_iota(jnp.int32, sq.shape, 0)
               + pl.program_id(0) * tile_rows)
        sq = jnp.where(row < valid_rows, sq, 0.0)
    out_ref[0, 0] = jnp.sum(sq)


def fcmse_loss(output, target, target_weight=None, use_target_weight=True):
    """JAX/Pallas equivalent of FCMSELoss.forward. Returns an f32 scalar."""
    B, J = output.shape[0], output.shape[1]
    pred = jnp.reshape(output, (B, J, -1))
    gt = jnp.reshape(target, (B, J, -1))
    K = pred.shape[-1]
    N = B * J * K

    use_tw = bool(use_target_weight)
    if use_tw and target_weight is None:
        raise ValueError("use_target_weight=True requires target_weight")

    sub = max(_sublane_mult(pred.dtype), _sublane_mult(gt.dtype))
    if use_tw:
        w_bj = jnp.reshape(target_weight, (B * J,))
        sub = max(sub, _sublane_mult(w_bj.dtype))

    # ---- choose layout ------------------------------------------------------
    two_d_path = False
    if use_tw and K > 1 and K % _LANES == 0:
        row_bytes_2d = (K * (pred.dtype.itemsize + gt.dtype.itemsize)
                        + w_bj.dtype.itemsize)
        if 2 * row_bytes_2d * sub <= _VMEM_BUDGET_BYTES:
            two_d_path = True

    if two_d_path:
        # (B*J, K) layout (free reshape), compact per-row weights.
        BJ = B * J
        pred2 = jnp.reshape(pred, (BJ, K))
        gt2 = jnp.reshape(gt, (BJ, K))
        w2 = jnp.reshape(w_bj, (BJ, 1))
        tile_rows = _pick_tile_rows(BJ, row_bytes_2d, sub)
        num_tiles = -(-BJ // tile_rows)
        needs_mask = (BJ % tile_rows) != 0
        valid_rows = BJ
        data_spec = pl.BlockSpec((tile_rows, K), lambda i: (i, 0))
        w_spec = pl.BlockSpec((tile_rows, 1), lambda i: (i, 0))
        args = [pred2, gt2, w2]
        in_specs = [data_spec, data_spec, w_spec]
    else:
        # Lane-dense flat (rows, 128) layout.
        total_rows = -(-N // _LANES)
        padded_n = total_rows * _LANES

        def _prep(x):
            x = jnp.reshape(x, (-1,))
            if padded_n != N:
                # TODO(synk): ragged N (not a multiple of 128) still pays one
                # XLA pad copy per stream; zero padding keeps the sum exact.
                x = jnp.pad(x, (0, padded_n - N))
            return jnp.reshape(x, (total_rows, _LANES))

        args = [_prep(pred), _prep(gt)]
        row_bytes = _LANES * (pred.dtype.itemsize + gt.dtype.itemsize)
        if use_tw:
            if K == 1:
                w_full = w_bj  # already exactly one weight per element
            else:
                # TODO(synk): K > 1 with K % 128 != 0 falls back to a
                # materialized broadcast weight (one extra HBM stream).
                w_full = jnp.broadcast_to(jnp.reshape(w_bj, (B, J, 1)),
                                          (B, J, K))
            args.append(_prep(w_full))
            row_bytes += _LANES * w_bj.dtype.itemsize
        tile_rows = _pick_tile_rows(total_rows, row_bytes, sub)
        num_tiles = -(-total_rows // tile_rows)
        needs_mask = (total_rows % tile_rows) != 0
        valid_rows = total_rows
        tile_spec = pl.BlockSpec((tile_rows, _LANES), lambda i: (i, 0))
        in_specs = [tile_spec] * len(args)

    kernel = functools.partial(
        _fcmse_partial_kernel, use_tw=use_tw, tile_rows=tile_rows,
        valid_rows=valid_rows, needs_mask=needs_mask)

    bytes_accessed = sum(int(a.size) * a.dtype.itemsize for a in args)
    bytes_accessed += num_tiles * 4
    cost = pl.CostEstimate(flops=4 * N, transcendentals=0,
                           bytes_accessed=int(bytes_accessed))

    partials = pl.pallas_call(
        kernel,
        out_shape=jax.ShapeDtypeStruct((num_tiles, 1), jnp.float32),
        grid=(num_tiles,),
        in_specs=in_specs,
        out_specs=pl.BlockSpec((1, 1), lambda i: (i, 0),
                               memory_space=pltpu.MemorySpace.SMEM),
        compiler_params=pltpu.CompilerParams(
            dimension_semantics=("parallel",)),
        cost_estimate=cost,
    )(*args)

    # 0.5 * (1/J) * sum_j mean_{b,k}(...) == 0.5 / (B*J*K) * total_sum
    return (0.5 / (B * J * K)) * jnp.sum(partials)


def _fcmse_loss_ref(output, target, target_weight, use_target_weight):
    """Pure-JAX reference mirroring the PyTorch per-joint loop."""
    B, J = output.shape[0], output.shape[1]
    pred = jnp.reshape(output, (B, J, -1)).astype(jnp.float32)
    gt = jnp.reshape(target, (B, J, -1)).astype(jnp.float32)
    loss = 0.0
    for idx in range(J):
        hp = pred[:, idx, :]
        hg = gt[:, idx, :]
        if use_target_weight:
            w = jnp.reshape(target_weight, (B, J)).astype(jnp.float32)[:, idx:idx + 1]
            loss = loss + 0.5 * jnp.mean((hp * w - hg * w) ** 2)
        else:
            loss = loss + 0.5 * jnp.mean((hp - hg) ** 2)
    return loss / J


if __name__ == "__main__":
    key = jax.random.PRNGKey(0)
    k1, k2, k3, k4, k5, k6 = jax.random.split(key, 6)

    # --- small "FC" regression shape: one scalar per joint -------------------
    B, J = 8, 16
    output = jax.random.normal(k1, (B, J, 1), dtype=jnp.float32)
    target = jax.random.normal(k2, (B, J, 1), dtype=jnp.float32)
    target_weight = (jax.random.uniform(k3, (B, J, 1)) > 0.2).astype(jnp.float32)

    loss_tw = fcmse_loss(output, target, target_weight, use_target_weight=True)
    jax.block_until_ready(loss_tw)
    ref_tw = _fcmse_loss_ref(output, target, target_weight, True)
    assert jnp.allclose(loss_tw, ref_tw, rtol=1e-5, atol=1e-6), (loss_tw, ref_tw)

    loss_no = fcmse_loss(output, target, None, use_target_weight=False)
    jax.block_until_ready(loss_no)
    ref_no = _fcmse_loss_ref(output, target, None, False)
    assert jnp.allclose(loss_no, ref_no, rtol=1e-5, atol=1e-6), (loss_no, ref_no)

    # --- odd J (ragged N -> pad fallback), bf16 inputs ------------------------
    B2, J2 = 32, 17
    out2 = jax.random.normal(k4, (B2, J2, 1), dtype=jnp.bfloat16)
    tgt2 = jax.random.normal(k5, (B2, J2, 1), dtype=jnp.bfloat16)
    tw2 = (jax.random.uniform(k6, (B2, J2, 1)) > 0.2).astype(jnp.bfloat16)
    loss2 = fcmse_loss(out2, tgt2, tw2, use_target_weight=True)
    jax.block_until_ready(loss2)
    ref2 = _fcmse_loss_ref(out2, tgt2, tw2, True)
    assert jnp.allclose(loss2, ref2, rtol=2e-2, atol=2e-3), (loss2, ref2)

    # --- larger flattened size (multi-tile flat path, K not mult of 128) -----
    B3, J3, K3 = 128, 17, 32
    out3 = jax.random.normal(k1, (B3, J3, K3), dtype=jnp.float32)
    tgt3 = jax.random.normal(k2, (B3, J3, K3), dtype=jnp.float32)
    tw3 = (jax.random.uniform(k3, (B3, J3, 1)) > 0.2).astype(jnp.float32)
    loss3 = fcmse_loss(out3, tgt3, tw3, use_target_weight=True)
    jax.block_until_ready(loss3)
    ref3 = _fcmse_loss_ref(out3, tgt3, tw3, True)
    assert jnp.allclose(loss3, ref3, rtol=1e-4, atol=1e-5), (loss3, ref3)

    # --- K multiple of 128: (B*J, K) path with compact per-row weights -------
    B4, J4, K4 = 16, 17, 128
    out4 = jax.random.normal(k4, (B4, J4, K4), dtype=jnp.float32)
    tgt4 = jax.random.normal(k5, (B4, J4, K4), dtype=jnp.float32)
    tw4 = (jax.random.uniform(k6, (B4, J4, 1)) > 0.2).astype(jnp.float32)
    loss4 = fcmse_loss(out4, tgt4, tw4, use_target_weight=True)
    jax.block_until_ready(loss4)
    ref4 = _fcmse_loss_ref(out4, tgt4, tw4, True)
    assert jnp.allclose(loss4, ref4, rtol=1e-4, atol=1e-5), (loss4, ref4)

    print("KERNEL_OK")
</pallas_src>

<mosaic_0001>
module attributes {stable_mosaic.version = 11 : i64} {
  func.func @_fcmse_partial_kernel(%arg0: i32, %arg1: memref<8x128xf32, #tpu.memory_space<vmem>>, %arg2: memref<8x128xf32, #tpu.memory_space<vmem>>, %arg3: memref<8x128xf32, #tpu.memory_space<vmem>>, %arg4: memref<1x1xf32, #tpu.memory_space<smem>>) attributes {dimension_semantics = [#tpu.dimension_semantics<parallel>], iteration_bounds = array<i64: 1>, scalar_prefetch = 0 : i64, scratch_operands = 0 : i64, tpu.core_type = #tpu.core_type<tc>, window_params = [{transform_indices = @transform_0, window_bounds = array<i64: 8, 128>}, {transform_indices = @transform_1, window_bounds = array<i64: 8, 128>}, {transform_indices = @transform_2, window_bounds = array<i64: 8, 128>}, {transform_indices = @transform_3, window_bounds = array<i64: 1, 1>}]} {
    %c0 = arith.constant 0 : index
    %c0_0 = arith.constant 0 : index
    %0 = vector.load %arg1[%c0, %c0_0] : memref<8x128xf32, #tpu.memory_space<vmem>>, vector<8x128xf32>
    %c0_1 = arith.constant 0 : index
    %c0_2 = arith.constant 0 : index
    %1 = vector.load %arg2[%c0_1, %c0_2] : memref<8x128xf32, #tpu.memory_space<vmem>>, vector<8x128xf32>
    %2 = arith.subf %0, %1 : vector<8x128xf32>
    %c0_3 = arith.constant 0 : index
    %c0_4 = arith.constant 0 : index
    %3 = vector.load %arg3[%c0_3, %c0_4] : memref<8x128xf32, #tpu.memory_space<vmem>>, vector<8x128xf32>
    %4 = arith.mulf %2, %3 : vector<8x128xf32>
    %5 = arith.mulf %4, %4 : vector<8x128xf32>
    %6 = tpu.iota {dimensions = array<i32: 0>} : vector<8x128xi32>
    %c8_i32 = arith.constant 8 : i32
    %7 = arith.muli %arg0, %c8_i32 : i32
    %8 = vector.broadcast %7 : i32 to vector<8x128xi32>
    %9 = arith.addi %6, %8 : vector<8x128xi32>
    %c1_i32 = arith.constant 1 : i32
    %10 = vector.broadcast %c1_i32 : i32 to vector<8x128xi32>
    %11 = arith.cmpi slt, %9, %10 : vector<8x128xi32>
    %cst = arith.constant 0.000000e+00 : f32
    %12 = vector.broadcast %cst : f32 to vector<8x128xf32>
    %13 = arith.select %11, %5, %12 : vector<8x128xi1>, vector<8x128xf32>
    %14 = vector.shape_cast %13 : vector<8x128xf32> to vector<1x8x128xf32>
    %cst_5 = arith.constant dense<0.000000e+00> : vector<1xf32>
    %15 = vector.multi_reduction <add>, %14, %cst_5 [1, 2] : vector<1x8x128xf32> to vector<1xf32>
    %16 = vector.shape_cast %15 : vector<1xf32> to vector<1x1x1xf32>
    %17 = vector.extract %16[0, 0, 0] : f32 from vector<1x1x1xf32>
    %c0_6 = arith.constant 0 : index
    %c0_7 = arith.constant 0 : index
    %18 = memref.load %arg4[%c0_6, %c0_7] : memref<1x1xf32, #tpu.memory_space<smem>>
    memref.store %17, %arg4[%c0_6, %c0_7] : memref<1x1xf32, #tpu.memory_space<smem>>
    return
  }
  func.func @transform_0(%arg0: i32) -> (i32, i32) {
    %c0_i32 = arith.constant 0 : i32
    %c0_i32_0 = arith.constant 0 : i32
    return %arg0, %c0_i32 : i32, i32
  }
  func.func @transform_1(%arg0: i32) -> (i32, i32) {
    %c0_i32 = arith.constant 0 : i32
    %c0_i32_0 = arith.constant 0 : i32
    return %arg0, %c0_i32 : i32, i32
  }
  func.func @transform_2(%arg0: i32) -> (i32, i32) {
    %c0_i32 = arith.constant 0 : i32
    %c0_i32_0 = arith.constant 0 : i32
    return %arg0, %c0_i32 : i32, i32
  }
  func.func @transform_3(%arg0: i32) -> (i32, i32) {
    %c0_i32 = arith.constant 0 : i32
    %c0_i32_0 = arith.constant 0 : i32
    return %arg0, %c0_i32 : i32, i32
  }
}

</mosaic_0001>

<llo_original>
// kernel: tpu_custom_call.1
$region0: #{tpu_custom_call.1}
  #allocation0 [shape = 'u32[]', space=smem, size = 0x4, offset = 0x4, fixed_abs, tag = 'smem constant byte address 0x4 - core index']
  #allocation1 [shape = 'u32[72,128]{1,0:T(1,128)}', space=vmem, size = 0x9000, scoped, tag = 'internal scratch']
  %s0 = inlined_call_operand.hbm [shape: f32[1,128], index: 0, kind: input, shape index: {}]
  %s1 = inlined_call_operand.hbm [shape: f32[1,128], index: 1, kind: input, shape index: {}]
  %s2 = inlined_call_operand.vmem [shape: f32[1,128], index: 2, kind: input, shape index: {}]
  %s3 = inlined_call_operand.hbm [shape: f32[1,1], index: 3, kind: output, shape index: {}]
  %s4 = sld [smem:[#allocation0]]
  $region30: #{tpu_custom_call.1} parent=0
    _
  %s6 = ssub.s32 1, %s4
  %s7 = scalar_select 0, %s6, %s4
  $region1: #{tpu_custom_call.1} parent=0
    #allocation2 [shape = 'u8[4096]{0}', space=vmem, size = 0x1000, scoped, tag = 'input window, operand 0, single buffered']
    #allocation3 [shape = 's32[1]{0}', space=sflag, size = 0x4, scoped, tag = 'scoped memory for tpu_custom_call.1']
    #allocation4 [shape = 's32[1]{0}', space=sflag, size = 0x4, scoped, tag = 'scoped memory for tpu_custom_call.1']
    #allocation5 [shape = 'u8[4096]{0}', space=vmem, size = 0x1000, scoped, tag = 'input window, operand 1, single buffered']
    #allocation6 [shape = 's32[1]{0}', space=sflag, size = 0x4, scoped, tag = 'scoped memory for tpu_custom_call.1']
    #allocation7 [shape = 'u8[512]{0}', space=smem, size = 0x200, scoped, tag = 'output window, operand 0, single buffered']
    %8 = vsyncpa [#allocation3], 0
    %9 = vsyncpa [#allocation6], 0
    %10 = vsyncpa [#allocation4], 0
    // Predicated region
    $region2: #{tpu_custom_call.1} parent=1 // pred_check
      _
    $region3: #{tpu_custom_call.1} parent=1 // pred_check_branch
      %12 = sbr.rel (0) target = $region5
    $region4: #{tpu_custom_call.1} parent=1 // pred_region
      %14 = vsyncadd [#allocation3], 112
      %s15 = sshll.u32 %s0, 4
      %s16 = int_to_ptr.hbm [resolvable:$true] %s15
      %s17 = sshll.u32 [#allocation2], 4
      %s18 = int_to_ptr.vmem [resolvable:$true] %s17
      %23 = dma.hbm_to_vmem [thread:$0]  %s16, 16, %s18, [#allocation3], 16, 16, 1
    $region5: #{tpu_custom_call.1} parent=1 // pred_fallthru
      _
    // Predicated region
    $region6: #{tpu_custom_call.1} parent=1 // pred_check
      _
    $region7: #{tpu_custom_call.1} parent=1 // pred_check_branch
      %25 = sbr.rel (0) target = $region9
    $region8: #{tpu_custom_call.1} parent=1 // pred_region
      %27 = vsyncadd [#allocation6], 112
      %s28 = sshll.u32 %s1, 4
      %s29 = int_to_ptr.hbm [resolvable:$true] %s28
      %s30 = sshll.u32 [#allocation5], 4
      %s31 = int_to_ptr.vmem [resolvable:$true] %s30
      %36 = dma.hbm_to_vmem [thread:$0]  %s29, 16, %s31, [#allocation6], 16, 16, 1
    $region9: #{tpu_custom_call.1} parent=1 // pred_fallthru
      _
    // Predicated region
    $region10: #{tpu_custom_call.1} parent=1 // pred_check
      _
    $region11: #{tpu_custom_call.1} parent=1 // pred_check_branch
      %38 = sbr.rel (0) target = $region13
    $region12: #{tpu_custom_call.1} parent=1 // pred_region
      _
    $region13: #{tpu_custom_call.1} parent=1 // pred_fallthru
      _
    // Predicated region
    $region14: #{tpu_custom_call.1} parent=1 // pred_check
      _
    $region15: #{tpu_custom_call.1} parent=1 // pred_check_branch
      %40 = sbr.rel (0) target = $region17
    $region16: #{tpu_custom_call.1} parent=1 // pred_region
      %42 = dma.done [#allocation3], 128
    $region17: #{tpu_custom_call.1} parent=1 // pred_fallthru
      _
    // Predicated region
    $region18: #{tpu_custom_call.1} parent=1 // pred_check
      _
    $region19: #{tpu_custom_call.1} parent=1 // pred_check_branch
      %44 = sbr.rel (0) target = $region21
    $region20: #{tpu_custom_call.1} parent=1 // pred_region
      %46 = dma.done [#allocation6], 128
    $region21: #{tpu_custom_call.1} parent=1 // pred_fallthru
      _
    %v47 = vld [vmem:[#allocation2] sm:$0xff]
    %v48 = vld [vmem:[#allocation5] sm:$0xff]
    %v49 = vsub.f32 %v47, %v48
    %v50 = vld [vmem:[%s2] sm:$0xff]
    %v51 = vmul.f32 %v49, %v50
    %v52 = vmul.f32 %v51, %v51
    %v53 = vlaneseq
    %v54 = vshrl.u32 %v53, 7
    %s55 = smul.u32 0, 8
    %v56 = vstv %s55
    %v57 = vadd.s32 %v54, %v56
    %vm58 = vcmp.lt.s32.totalorder %v57, 1
    %v59 = vsel %vm58, %v52, 0.0
    %60 = vadd.xlane.f32.xlu0 %v59
    %v61 = vpop.xlane.xlu0 %60
    %v62 = vrot.slane %v61, 4
    %v63 = vadd.f32 %v61, %v62
    %v64 = vrot.slane %v63, 2
    %v65 = vadd.f32 %v63, %v64
    %v66 = vrot.slane %v65, 1
    %v67 = vadd.f32 %v65, %v66
    %s68 = vtos %v67
    %s69 = scalar_lea.smem [#allocation7], 0
    %70 = sst [smem:[%s69]] %s68
    // Predicated region
    $region22: #{tpu_custom_call.1} parent=1 // pred_check
      _
    $region23: #{tpu_custom_call.1} parent=1 // pred_check_branch
      %72 = sbr.rel (0) target = $region25
    $region24: #{tpu_custom_call.1} parent=1 // pred_region
      %74 = vsyncadd [#allocation4], 0
      %s76 = sshll.u32 %s3, 4
      %s77 = int_to_ptr.hbm [resolvable:$true] %s76
      %79 = dma.smem_to_hbm [#allocation7], 16, %s77, [#allocation4]
    $region25: #{tpu_custom_call.1} parent=1 // pred_fallthru
      _
    // Predicated region
    $region26: #{tpu_custom_call.1} parent=1 // pred_check
      _
    $region27: #{tpu_custom_call.1} parent=1 // pred_check_branch
      %81 = sbr.rel (0) target = $region29
    $region28: #{tpu_custom_call.1} parent=1 // pred_region
      %83 = dma.done [#allocation4], 16
    $region29: #{tpu_custom_call.1} parent=1 // pred_fallthru
      _
    %84 = sfence
    %85 = vsyncpa [#allocation3], 1
    %86 = vsyncpa [#allocation6], 1
    %87 = vsyncpa [#allocation4], 1

</llo_original>
